<compile_context>
chip_gen: v7x
topology: tpu7x:2x2x1
jax: 0.10.0
libtpu: 0.0.40
codegen_flags: <defaults>
</compile_context>

<pallas_src>
import jax
import jax.numpy as jnp
from jax.experimental import pallas as pl
from jax.experimental.pallas import tpu as pltpu

HIDDEN_DIM = 32
INPUT_SIZE = 1
N_LAYERS = 1
OUTPUT_SIZE = 1


def _rnn_kernel(x_ref, h0_ref, wih_ref, whh_t_ref, b_ref, fcw_ref, fcb_ref,
                out_ref, hn_ref):
    # x_ref:     (B, T)   input, input_size == 1 squeezed in the wrapper
    # h0_ref:    (B, H)
    # wih_ref:   (1, H)   == W_ih^T (single row since I == 1)
    # whh_t_ref: (H, H)   == W_hh^T
    # b_ref:     (1, H)   == b_ih + b_hh
    # fcw_ref:   (1, H)   fc weight
    # fcb_ref:   (1,)     fc bias (SMEM scalar)
    # out_ref:   (T, 1)   fc(out[-1, :, :])
    # hn_ref:    (B, H)
    B, T = x_ref.shape
    H = h0_ref.shape[-1]

    x_bt = x_ref[...]                                   # (B, T) f32
    wih = wih_ref[...]                                  # (1, H)
    b = b_ref[...]                                      # (1, H)
    whh_t = whh_t_ref[...]                              # (H, H), hoisted once

    # Input projection for all timesteps, held in registers (T*B*H = 512 f32).
    # I == 1, so this is a pure VPU broadcast-multiply; no MXU, no VMEM scratch.
    xw = [x_bt[:, t:t + 1] * wih + b for t in range(T)]  # T x (B, H)

    # Serial recurrence, fully unrolled (static T).  Only the last batch
    # element's hidden row is kept per step, in registers.
    h = h0_ref[...]                                     # (B, H)
    hlast_rows = []
    for t in range(T):
        h = jnp.tanh(xw[t] + jnp.dot(h, whh_t,
                                     preferred_element_type=jnp.float32))
        hlast_rows.append(h[B - 1:B, :])                # (1, H), register value
    hn_ref[...] = h                                     # (B, H)

    # fc head on out[-1, :, :] (last batch element, all timesteps).
    # VPU multiply + cross-lane reduce (XLU) instead of an M=1 MXU matmul;
    # one small store for the (T, 1) result.
    hlast = jnp.concatenate(hlast_rows, axis=0)         # (T, H)
    y = jnp.sum(hlast * fcw_ref[...], axis=-1, keepdims=True)  # (T, 1)
    out_ref[...] = y + fcb_ref[0]


def rnn_forward(x, hidden, params):
    """x: (B, T, I) float32; hidden: (n_layers, B, H) float32."""
    w_ih, w_hh, b_ih, b_hh, fc_w, fc_b = params
    B, T, I = x.shape
    H = HIDDEN_DIM

    # Layout plumbing in the wrapper (no transpose; just squeeze I == 1).
    x_bt = jnp.asarray(x, jnp.float32)[:, :, 0]               # (B, T)
    wih = jnp.asarray(w_ih, jnp.float32).reshape(1, H)        # == W_ih^T (I == 1)
    whh_t = jnp.asarray(w_hh, jnp.float32).T                  # (H, H)
    b = (jnp.asarray(b_ih, jnp.float32)
         + jnp.asarray(b_hh, jnp.float32)).reshape(1, H)      # (1, H)
    fcw = jnp.asarray(fc_w, jnp.float32).reshape(1, H)        # (1, H)
    fcb = jnp.asarray(fc_b, jnp.float32).reshape(1)           # (1,) scalar
    h0 = jnp.asarray(hidden, jnp.float32)[0]                  # (B, H)

    vmem = pl.BlockSpec(memory_space=pltpu.MemorySpace.VMEM)
    smem = pl.BlockSpec(memory_space=pltpu.MemorySpace.SMEM)

    out, hn = pl.pallas_call(
        _rnn_kernel,
        out_shape=(jax.ShapeDtypeStruct((T, OUTPUT_SIZE), jnp.float32),
                   jax.ShapeDtypeStruct((B, H), jnp.float32)),
        in_specs=[vmem, vmem, vmem, vmem, vmem, vmem, smem],
        out_specs=(vmem, vmem),
    )(x_bt, h0, wih, whh_t, b, fcw, fcb)

    return out, hn.reshape(N_LAYERS, B, H)


def rnn_reference(x, hidden, params):
    """Pure-JAX reference matching PyTorch nn.RNN(tanh) + fc(out[-1, :, :])."""
    w_ih, w_hh, b_ih, b_hh, fc_w, fc_b = params
    B, T, I = x.shape
    h = hidden[0]
    outs = []
    for t in range(T):
        h = jnp.tanh(x[:, t, :] @ w_ih.T + b_ih + h @ w_hh.T + b_hh)
        outs.append(h)
    out = jnp.stack(outs, axis=1)        # (B, T, H)  batch_first output
    y = out[-1, :, :] @ fc_w.T + fc_b    # (T, output_size)
    return y, h[None]


def init_params(key):
    """Deterministic params with PyTorch-style U(-1/sqrt(H), 1/sqrt(H)) init."""
    k = 1.0 / jnp.sqrt(jnp.float32(HIDDEN_DIM))
    ks = jax.random.split(key, 6)
    w_ih = jax.random.uniform(ks[0], (HIDDEN_DIM, INPUT_SIZE), jnp.float32, -k, k)
    w_hh = jax.random.uniform(ks[1], (HIDDEN_DIM, HIDDEN_DIM), jnp.float32, -k, k)
    b_ih = jax.random.uniform(ks[2], (HIDDEN_DIM,), jnp.float32, -k, k)
    b_hh = jax.random.uniform(ks[3], (HIDDEN_DIM,), jnp.float32, -k, k)
    fc_w = jax.random.uniform(ks[4], (OUTPUT_SIZE, HIDDEN_DIM), jnp.float32, -k, k)
    fc_b = jax.random.uniform(ks[5], (OUTPUT_SIZE,), jnp.float32, -k, k)
    return w_ih, w_hh, b_ih, b_hh, fc_w, fc_b


if __name__ == "__main__":
    B, T = 2, 8
    key = jax.random.PRNGKey(0)
    kx, kh, kp = jax.random.split(key, 3)

    x = jax.random.normal(kx, (B, T, INPUT_SIZE), jnp.float32)
    hidden = jax.random.normal(kh, (N_LAYERS, B, HIDDEN_DIM), jnp.float32)
    params = init_params(kp)

    out, hn = rnn_forward(x, hidden, params)
    out = jax.block_until_ready(out)
    hn = jax.block_until_ready(hn)

    ref_out, ref_hn = rnn_reference(x, hidden, params)
    assert out.shape == (T, OUTPUT_SIZE) and hn.shape == (N_LAYERS, B, HIDDEN_DIM)
    assert jnp.allclose(out, ref_out, atol=1e-5, rtol=1e-5)
    assert jnp.allclose(hn, ref_hn, atol=1e-5, rtol=1e-5)

    print("KERNEL_OK")
</pallas_src>

<mosaic_0001>
module attributes {stable_mosaic.version = 11 : i64} {
  func.func @_rnn_kernel(%arg0: memref<2x8xf32, #tpu.memory_space<vmem>>, %arg1: memref<2x32xf32, #tpu.memory_space<vmem>>, %arg2: memref<1x32xf32, #tpu.memory_space<vmem>>, %arg3: memref<32x32xf32, #tpu.memory_space<vmem>>, %arg4: memref<1x32xf32, #tpu.memory_space<vmem>>, %arg5: memref<1x32xf32, #tpu.memory_space<vmem>>, %arg6: memref<1xf32, #tpu.memory_space<smem>>, %arg7: memref<8x1xf32, #tpu.memory_space<vmem>>, %arg8: memref<2x32xf32, #tpu.memory_space<vmem>>) attributes {dimension_semantics = [], scalar_prefetch = 0 : i64, scratch_operands = 0 : i64, tpu.core_type = #tpu.core_type<tc>} {
    %c0 = arith.constant 0 : index
    %c0_0 = arith.constant 0 : index
    %0 = vector.load %arg0[%c0, %c0_0] : memref<2x8xf32, #tpu.memory_space<vmem>>, vector<2x8xf32>
    %c0_1 = arith.constant 0 : index
    %c0_2 = arith.constant 0 : index
    %1 = vector.load %arg2[%c0_1, %c0_2] : memref<1x32xf32, #tpu.memory_space<vmem>>, vector<1x32xf32>
    %c0_3 = arith.constant 0 : index
    %c0_4 = arith.constant 0 : index
    %2 = vector.load %arg4[%c0_3, %c0_4] : memref<1x32xf32, #tpu.memory_space<vmem>>, vector<1x32xf32>
    %c0_5 = arith.constant 0 : index
    %c0_6 = arith.constant 0 : index
    %3 = vector.load %arg3[%c0_5, %c0_6] : memref<32x32xf32, #tpu.memory_space<vmem>>, vector<32x32xf32>
    %4 = vector.extract_strided_slice %0 {offsets = [0, 0], sizes = [2, 1], strides = [1, 1]} : vector<2x8xf32> to vector<2x1xf32>
    %5 = vector.broadcast %4 : vector<2x1xf32> to vector<2x32xf32>
    %6 = vector.broadcast %1 : vector<1x32xf32> to vector<2x32xf32>
    %7 = arith.mulf %5, %6 : vector<2x32xf32>
    %8 = vector.broadcast %2 : vector<1x32xf32> to vector<2x32xf32>
    %9 = arith.addf %7, %8 : vector<2x32xf32>
    %10 = vector.extract_strided_slice %0 {offsets = [0, 1], sizes = [2, 1], strides = [1, 1]} : vector<2x8xf32> to vector<2x1xf32>
    %11 = vector.broadcast %10 : vector<2x1xf32> to vector<2x32xf32>
    %12 = vector.broadcast %1 : vector<1x32xf32> to vector<2x32xf32>
    %13 = arith.mulf %11, %12 : vector<2x32xf32>
    %14 = vector.broadcast %2 : vector<1x32xf32> to vector<2x32xf32>
    %15 = arith.addf %13, %14 : vector<2x32xf32>
    %16 = vector.extract_strided_slice %0 {offsets = [0, 2], sizes = [2, 1], strides = [1, 1]} : vector<2x8xf32> to vector<2x1xf32>
    %17 = vector.broadcast %16 : vector<2x1xf32> to vector<2x32xf32>
    %18 = vector.broadcast %1 : vector<1x32xf32> to vector<2x32xf32>
    %19 = arith.mulf %17, %18 : vector<2x32xf32>
    %20 = vector.broadcast %2 : vector<1x32xf32> to vector<2x32xf32>
    %21 = arith.addf %19, %20 : vector<2x32xf32>
    %22 = vector.extract_strided_slice %0 {offsets = [0, 3], sizes = [2, 1], strides = [1, 1]} : vector<2x8xf32> to vector<2x1xf32>
    %23 = vector.broadcast %22 : vector<2x1xf32> to vector<2x32xf32>
    %24 = vector.broadcast %1 : vector<1x32xf32> to vector<2x32xf32>
    %25 = arith.mulf %23, %24 : vector<2x32xf32>
    %26 = vector.broadcast %2 : vector<1x32xf32> to vector<2x32xf32>
    %27 = arith.addf %25, %26 : vector<2x32xf32>
    %28 = vector.extract_strided_slice %0 {offsets = [0, 4], sizes = [2, 1], strides = [1, 1]} : vector<2x8xf32> to vector<2x1xf32>
    %29 = vector.broadcast %28 : vector<2x1xf32> to vector<2x32xf32>
    %30 = vector.broadcast %1 : vector<1x32xf32> to vector<2x32xf32>
    %31 = arith.mulf %29, %30 : vector<2x32xf32>
    %32 = vector.broadcast %2 : vector<1x32xf32> to vector<2x32xf32>
    %33 = arith.addf %31, %32 : vector<2x32xf32>
    %34 = vector.extract_strided_slice %0 {offsets = [0, 5], sizes = [2, 1], strides = [1, 1]} : vector<2x8xf32> to vector<2x1xf32>
    %35 = vector.broadcast %34 : vector<2x1xf32> to vector<2x32xf32>
    %36 = vector.broadcast %1 : vector<1x32xf32> to vector<2x32xf32>
    %37 = arith.mulf %35, %36 : vector<2x32xf32>
    %38 = vector.broadcast %2 : vector<1x32xf32> to vector<2x32xf32>
    %39 = arith.addf %37, %38 : vector<2x32xf32>
    %40 = vector.extract_strided_slice %0 {offsets = [0, 6], sizes = [2, 1], strides = [1, 1]} : vector<2x8xf32> to vector<2x1xf32>
    %41 = vector.broadcast %40 : vector<2x1xf32> to vector<2x32xf32>
    %42 = vector.broadcast %1 : vector<1x32xf32> to vector<2x32xf32>
    %43 = arith.mulf %41, %42 : vector<2x32xf32>
    %44 = vector.broadcast %2 : vector<1x32xf32> to vector<2x32xf32>
    %45 = arith.addf %43, %44 : vector<2x32xf32>
    %46 = vector.extract_strided_slice %0 {offsets = [0, 7], sizes = [2, 1], strides = [1, 1]} : vector<2x8xf32> to vector<2x1xf32>
    %47 = vector.broadcast %46 : vector<2x1xf32> to vector<2x32xf32>
    %48 = vector.broadcast %1 : vector<1x32xf32> to vector<2x32xf32>
    %49 = arith.mulf %47, %48 : vector<2x32xf32>
    %50 = vector.broadcast %2 : vector<1x32xf32> to vector<2x32xf32>
    %51 = arith.addf %49, %50 : vector<2x32xf32>
    %c0_7 = arith.constant 0 : index
    %c0_8 = arith.constant 0 : index
    %52 = vector.load %arg1[%c0_7, %c0_8] : memref<2x32xf32, #tpu.memory_space<vmem>>, vector<2x32xf32>
    %cst = arith.constant dense<0.000000e+00> : vector<2x32xf32>
    %53 = tpu.matmul %52, %3, %cst {dimension_numbers = #tpu.dot_dimension_numbers<[1], [0], [0], [1], [0, 0, 1, 1], [], []>} : vector<2x32xf32>, vector<32x32xf32>, vector<2x32xf32> -> vector<2x32xf32>
    %54 = arith.addf %9, %53 : vector<2x32xf32>
    %55 = math.tanh %54 : vector<2x32xf32>
    %56 = vector.extract_strided_slice %55 {offsets = [1, 0], sizes = [1, 32], strides = [1, 1]} : vector<2x32xf32> to vector<1x32xf32>
    %cst_9 = arith.constant dense<0.000000e+00> : vector<2x32xf32>
    %57 = tpu.matmul %55, %3, %cst_9 {dimension_numbers = #tpu.dot_dimension_numbers<[1], [0], [0], [1], [0, 0, 1, 1], [], []>} : vector<2x32xf32>, vector<32x32xf32>, vector<2x32xf32> -> vector<2x32xf32>
    %58 = arith.addf %15, %57 : vector<2x32xf32>
    %59 = math.tanh %58 : vector<2x32xf32>
    %60 = vector.extract_strided_slice %59 {offsets = [1, 0], sizes = [1, 32], strides = [1, 1]} : vector<2x32xf32> to vector<1x32xf32>
    %cst_10 = arith.constant dense<0.000000e+00> : vector<2x32xf32>
    %61 = tpu.matmul %59, %3, %cst_10 {dimension_numbers = #tpu.dot_dimension_numbers<[1], [0], [0], [1], [0, 0, 1, 1], [], []>} : vector<2x32xf32>, vector<32x32xf32>, vector<2x32xf32> -> vector<2x32xf32>
    %62 = arith.addf %21, %61 : vector<2x32xf32>
    %63 = math.tanh %62 : vector<2x32xf32>
    %64 = vector.extract_strided_slice %63 {offsets = [1, 0], sizes = [1, 32], strides = [1, 1]} : vector<2x32xf32> to vector<1x32xf32>
    %cst_11 = arith.constant dense<0.000000e+00> : vector<2x32xf32>
    %65 = tpu.matmul %63, %3, %cst_11 {dimension_numbers = #tpu.dot_dimension_numbers<[1], [0], [0], [1], [0, 0, 1, 1], [], []>} : vector<2x32xf32>, vector<32x32xf32>, vector<2x32xf32> -> vector<2x32xf32>
    %66 = arith.addf %27, %65 : vector<2x32xf32>
    %67 = math.tanh %66 : vector<2x32xf32>
    %68 = vector.extract_strided_slice %67 {offsets = [1, 0], sizes = [1, 32], strides = [1, 1]} : vector<2x32xf32> to vector<1x32xf32>
    %cst_12 = arith.constant dense<0.000000e+00> : vector<2x32xf32>
    %69 = tpu.matmul %67, %3, %cst_12 {dimension_numbers = #tpu.dot_dimension_numbers<[1], [0], [0], [1], [0, 0, 1, 1], [], []>} : vector<2x32xf32>, vector<32x32xf32>, vector<2x32xf32> -> vector<2x32xf32>
    %70 = arith.addf %33, %69 : vector<2x32xf32>
    %71 = math.tanh %70 : vector<2x32xf32>
    %72 = vector.extract_strided_slice %71 {offsets = [1, 0], sizes = [1, 32], strides = [1, 1]} : vector<2x32xf32> to vector<1x32xf32>
    %cst_13 = arith.constant dense<0.000000e+00> : vector<2x32xf32>
    %73 = tpu.matmul %71, %3, %cst_13 {dimension_numbers = #tpu.dot_dimension_numbers<[1], [0], [0], [1], [0, 0, 1, 1], [], []>} : vector<2x32xf32>, vector<32x32xf32>, vector<2x32xf32> -> vector<2x32xf32>
    %74 = arith.addf %39, %73 : vector<2x32xf32>
    %75 = math.tanh %74 : vector<2x32xf32>
    %76 = vector.extract_strided_slice %75 {offsets = [1, 0], sizes = [1, 32], strides = [1, 1]} : vector<2x32xf32> to vector<1x32xf32>
    %cst_14 = arith.constant dense<0.000000e+00> : vector<2x32xf32>
    %77 = tpu.matmul %75, %3, %cst_14 {dimension_numbers = #tpu.dot_dimension_numbers<[1], [0], [0], [1], [0, 0, 1, 1], [], []>} : vector<2x32xf32>, vector<32x32xf32>, vector<2x32xf32> -> vector<2x32xf32>
    %78 = arith.addf %45, %77 : vector<2x32xf32>
    %79 = math.tanh %78 : vector<2x32xf32>
    %80 = vector.extract_strided_slice %79 {offsets = [1, 0], sizes = [1, 32], strides = [1, 1]} : vector<2x32xf32> to vector<1x32xf32>
    %cst_15 = arith.constant dense<0.000000e+00> : vector<2x32xf32>
    %81 = tpu.matmul %79, %3, %cst_15 {dimension_numbers = #tpu.dot_dimension_numbers<[1], [0], [0], [1], [0, 0, 1, 1], [], []>} : vector<2x32xf32>, vector<32x32xf32>, vector<2x32xf32> -> vector<2x32xf32>
    %82 = arith.addf %51, %81 : vector<2x32xf32>
    %83 = math.tanh %82 : vector<2x32xf32>
    %84 = vector.extract_strided_slice %83 {offsets = [1, 0], sizes = [1, 32], strides = [1, 1]} : vector<2x32xf32> to vector<1x32xf32>
    %c0_16 = arith.constant 0 : index
    %c0_17 = arith.constant 0 : index
    %85 = vector.load %arg8[%c0_16, %c0_17] : memref<2x32xf32, #tpu.memory_space<vmem>>, vector<2x32xf32>
    tpu.vector_store %arg8[%c0_16, %c0_17], %83 {strides = array<i32>} : memref<2x32xf32, #tpu.memory_space<vmem>>, vector<2x32xf32>,
    %86 = tpu.concatenate %56, %60, %64, %68, %72, %76, %80, %84 in 0 : vector<1x32xf32>, vector<1x32xf32>, vector<1x32xf32>, vector<1x32xf32>, vector<1x32xf32>, vector<1x32xf32>, vector<1x32xf32>, vector<1x32xf32> -> vector<8x32xf32>
    %c0_18 = arith.constant 0 : index
    %c0_19 = arith.constant 0 : index
    %87 = vector.load %arg5[%c0_18, %c0_19] : memref<1x32xf32, #tpu.memory_space<vmem>>, vector<1x32xf32>
    %88 = vector.broadcast %87 : vector<1x32xf32> to vector<8x32xf32>
    %89 = arith.mulf %86, %88 : vector<8x32xf32>
    %cst_20 = arith.constant dense<0.000000e+00> : vector<8xf32>
    %90 = vector.multi_reduction <add>, %89, %cst_20 [1] : vector<8x32xf32> to vector<8xf32>
    %91 = vector.shape_cast %90 : vector<8xf32> to vector<8x1xf32>
    %c0_21 = arith.constant 0 : index
    %92 = memref.load %arg6[%c0_21] : memref<1xf32, #tpu.memory_space<smem>>
    %93 = vector.broadcast %92 : f32 to vector<8x1xf32>
    %94 = arith.addf %91, %93 : vector<8x1xf32>
    %c0_22 = arith.constant 0 : index
    %c0_23 = arith.constant 0 : index
    %95 = vector.load %arg7[%c0_22, %c0_23] : memref<8x1xf32, #tpu.memory_space<vmem>>, vector<8x1xf32>
    tpu.vector_store %arg7[%c0_22, %c0_23], %94 {strides = array<i32>} : memref<8x1xf32, #tpu.memory_space<vmem>>, vector<8x1xf32>,
    return
  }
}

</mosaic_0001>

<llo_original>
// kernel: tpu_custom_call.1
$region0: #{tpu_custom_call.1}
  #allocation0 [shape = 'u32[]', space=smem, size = 0x4, offset = 0x4, fixed_abs, tag = 'smem constant byte address 0x4 - core index']
  #allocation1 [shape = 'u32[144,128]{1,0:T(1,128)}', space=vmem, size = 0x12000, scoped, tag = 'internal scratch']
  #allocation2 [shape = 'f32[1]{0:T(128)S(6)}', space=smem, size = 0x200, scoped, tag = 'scoped memory for tpu_custom_call.1']
  %s0 = inlined_call_operand.vmem [shape: f32[2,8], index: 0, kind: input, shape index: {}]
  %s1 = inlined_call_operand.vmem [shape: f32[2,32], index: 1, kind: input, shape index: {}]
  %s2 = inlined_call_operand.vmem [shape: f32[1,32], index: 2, kind: input, shape index: {}]
  %s3 = inlined_call_operand.hbm [shape: f32[32,32], index: 3, kind: input, shape index: {}]
  %s4 = inlined_call_operand.vmem [shape: f32[1,32], index: 4, kind: input, shape index: {}]
  %s5 = inlined_call_operand.vmem [shape: f32[1,32], index: 5, kind: input, shape index: {}]
  %s6 = inlined_call_operand.<no memory space> [shape: f32[1], index: 6, kind: input, shape index: {}]
  %s7 = inlined_call_operand.vmem [shape: f32[8,1], index: 7, kind: output, shape index: {0}]
  %s8 = inlined_call_operand.hbm [shape: f32[2,32], index: 8, kind: output, shape index: {1}]
  %9 = xla_tuple %s7, %s8
  %s10 = sld [smem:[#allocation0]]
  $region50: #{tpu_custom_call.1} parent=0
    _
  %s12 = ssub.s32 1, %s10
  %s13 = scalar_select 0, %s12, %s10
  %14 = sst [smem:[#allocation2]] %s6
  $region1: #{tpu_custom_call.1} parent=0
    #allocation3 [shape = 'u8[16384]{0}', space=vmem, size = 0x4000, scoped, tag = 'input window, operand 3, single buffered']
    #allocation4 [shape = 's32[1]{0}', space=sflag, size = 0x4, scoped, tag = 'scoped memory for tpu_custom_call.1']
    #allocation5 [shape = 's32[1]{0}', space=sflag, size = 0x4, scoped, tag = 'scoped memory for tpu_custom_call.1']
    #allocation6 [shape = 'u8[1024]{0}', space=vmem, size = 0x400, scoped, tag = 'output window, operand 1, single buffered']
    %15 = vsyncpa [#allocation4], 0
    %16 = vsyncpa [#allocation5], 0
    // Predicated region
    $region2: #{tpu_custom_call.1} parent=1 // pred_check
      _
    $region3: #{tpu_custom_call.1} parent=1 // pred_check_branch
      %18 = sbr.rel (0) target = $region5
    $region4: #{tpu_custom_call.1} parent=1 // pred_region
      _
    $region5: #{tpu_custom_call.1} parent=1 // pred_fallthru
      _
    // Predicated region
    $region6: #{tpu_custom_call.1} parent=1 // pred_check
      _
    $region7: #{tpu_custom_call.1} parent=1 // pred_check_branch
      %20 = sbr.rel (0) target = $region9
    $region8: #{tpu_custom_call.1} parent=1 // pred_region
      _
    $region9: #{tpu_custom_call.1} parent=1 // pred_fallthru
      _
    // Predicated region
    $region10: #{tpu_custom_call.1} parent=1 // pred_check
      _
    $region11: #{tpu_custom_call.1} parent=1 // pred_check_branch
      %22 = sbr.rel (0) target = $region13
    $region12: #{tpu_custom_call.1} parent=1 // pred_region
      _
    $region13: #{tpu_custom_call.1} parent=1 // pred_fallthru
      _
    // Predicated region
    $region14: #{tpu_custom_call.1} parent=1 // pred_check
      _
    $region15: #{tpu_custom_call.1} parent=1 // pred_check_branch
      %24 = sbr.rel (0) target = $region17
    $region16: #{tpu_custom_call.1} parent=1 // pred_region
      %s26 = ssub.s32 512, 512
      %27 = vsyncadd [#allocation4], %s26
      %s28 = sshll.u32 [#allocation3], 4
      %s29 = int_to_ptr.vmem [resolvable:$true] %s28
      %34 = dma.hbm_to_vmem [thread:$0]  %s3, 512, %s29, [#allocation4], 128, 128, 8
    $region17: #{tpu_custom_call.1} parent=1 // pred_fallthru
      _
    // Predicated region
    $region18: #{tpu_custom_call.1} parent=1 // pred_check
      _
    $region19: #{tpu_custom_call.1} parent=1 // pred_check_branch
      %36 = sbr.rel (0) target = $region21
    $region20: #{tpu_custom_call.1} parent=1 // pred_region
      _
    $region21: #{tpu_custom_call.1} parent=1 // pred_fallthru
      _
    // Predicated region
    $region22: #{tpu_custom_call.1} parent=1 // pred_check
      _
    $region23: #{tpu_custom_call.1} parent=1 // pred_check_branch
      %38 = sbr.rel (0) target = $region25
    $region24: #{tpu_custom_call.1} parent=1 // pred_region
      _
    $region25: #{tpu_custom_call.1} parent=1 // pred_fallthru
      _
    // Predicated region
    $region26: #{tpu_custom_call.1} parent=1 // pred_check
      _
    $region27: #{tpu_custom_call.1} parent=1 // pred_check_branch
      %40 = sbr.rel (0) target = $region29
    $region28: #{tpu_custom_call.1} parent=1 // pred_region
      _
    $region29: #{tpu_custom_call.1} parent=1 // pred_fallthru
      _
    // Predicated region
    $region30: #{tpu_custom_call.1} parent=1 // pred_check
      _
    $region31: #{tpu_custom_call.1} parent=1 // pred_check_branch
      %42 = sbr.rel (0) target = $region33
    $region32: #{tpu_custom_call.1} parent=1 // pred_region
      %43 = dma.done [#allocation4], 512
    $region33: #{tpu_custom_call.1} parent=1 // pred_fallthru
      _
    %v44 = vld [vmem:[%s0] sm:$0x3]
    %v45 = vld [vmem:[%s2] sm:$0x1]
    %v46 = vld [vmem:[%s4] sm:$0x1]
    %v47 = vld [vmem:[#allocation3] sm:$0xff]
    %v48 = vld [vmem:[#allocation3 + $0x8] sm:$0xff]
    %v49 = vld [vmem:[#allocation3 + $0x10] sm:$0xff]
    %v50 = vld [vmem:[#allocation3 + $0x18] sm:$0xff]
    %52 = vset.pattern.permute.xlu0 0
    %53 = vperm.xlu0 %52, %v44
    %v54 = vpop.permute.xlu0 %53
    %v57 = vlaneseq
    %v58 = vshrl.u32 %v57, 7
    %v59 = vsub.s32 0, %v58
    %v60 = vrot.slane %v45, %v59
    %v62 = vmul.f32 %v54, %v60
    %v64 = vlaneseq
    %v65 = vshrl.u32 %v64, 7
    %v66 = vsub.s32 0, %v65
    %v67 = vrot.slane %v46, %v66
    %v69 = vadd.f32 %v62, %v67
    %70 = vset.pattern.permute.xlu0 1
    %71 = vperm.xlu0 %70, %v44
    %v72 = vpop.permute.xlu0 %71
    %v74 = vmul.f32 %v72, %v60
    %v75 = vadd.f32 %v74, %v67
    %76 = vset.pattern.permute.xlu0 2
    %77 = vperm.xlu0 %76, %v44
    %v78 = vpop.permute.xlu0 %77
    %v80 = vmul.f32 %v78, %v60
    %v81 = vadd.f32 %v80, %v67
    %82 = vset.pattern.permute.xlu0 3
    %83 = vperm.xlu0 %82, %v44
    %v84 = vpop.permute.xlu0 %83
    %v86 = vmul.f32 %v84, %v60
    %v87 = vadd.f32 %v86, %v67
    %88 = vset.pattern.permute.xlu0 4
    %89 = vperm.xlu0 %88, %v44
    %v90 = vpop.permute.xlu0 %89
    %v92 = vmul.f32 %v90, %v60
    %v93 = vadd.f32 %v92, %v67
    %94 = vset.pattern.permute.xlu0 5
    %95 = vperm.xlu0 %94, %v44
    %v96 = vpop.permute.xlu0 %95
    %v98 = vmul.f32 %v96, %v60
    %v99 = vadd.f32 %v98, %v67
    %100 = vset.pattern.permute.xlu0 6
    %101 = vperm.xlu0 %100, %v44
    %v102 = vpop.permute.xlu0 %101
    %v104 = vmul.f32 %v102, %v60
    %v105 = vadd.f32 %v104, %v67
    %106 = vset.pattern.permute.xlu0 7
    %107 = vperm.xlu0 %106, %v44
    %v108 = vpop.permute.xlu0 %107
    %v110 = vmul.f32 %v108, %v60
    %v111 = vadd.f32 %v110, %v67
    %v112 = vld [vmem:[%s1] sm:$0x3]
    %vm113 = vcmask 261120
    %v115 = vsel %vm113, %v112, 0
    %117 = vmatprep.subr.mxu0 0.0
    %118 = vmatpush1.msra.mxu0 %v47
    %119 = vmatprep.subr.mxu0 0.0
    %120 = vmatpush1.msra.mxu0 %v48
    %121 = vmatprep.subr.mxu0 0.0
    %122 = vmatpush1.msra.mxu0 %v49
    %123 = vmatprep.subr.mxu0 0.0
    %124 = vmatpush1.msra.mxu0 %v50
    %125 = vmatprep.subr.mxu0 0.0
    %126 = vmatpush1.msra.mxu0 0.0
    %127 = vmatprep.subr.mxu0 0.0
    %128 = vmatpush1.msra.mxu0 0.0
    %129 = vmatprep.subr.mxu0 0.0
    %130 = vmatpush1.msra.mxu0 0.0
    %131 = vmatprep.subr.mxu0 0.0
    %132 = vmatpush1.msra.mxu0 0.0
    %133 = vmatprep.subr.mxu0 0.0
    %134 = vmatpush1.msra.mxu0 0.0
    %135 = vmatprep.subr.mxu0 0.0
    %136 = vmatpush1.msra.mxu0 0.0
    %137 = vmatprep.subr.mxu0 0.0
    %138 = vmatpush1.msra.mxu0 0.0
    %139 = vmatprep.subr.mxu0 0.0
    %140 = vmatpush1.msra.mxu0 0.0
    %141 = vmatprep.subr.mxu0 0.0
    %142 = vmatpush1.msra.mxu0 0.0
    %143 = vmatprep.subr.mxu0 0.0
    %144 = vmatpush1.msra.mxu0 0.0
    %145 = vmatprep.subr.mxu0 0.0
    %146 = vmatpush1.msra.mxu0 0.0
    %147 = vmatprep.subr.mxu0 0.0
    %148 = vmatpush1.msra.mxu0 0.0
    %149 = vmatprep.subr.mxu0 0.0
    %150 = vmatpush1.msra.mxu0 0.0
    %151 = vmatprep.subr.mxu0 0.0
    %152 = vmatpush1.msra.mxu0 0.0
    %153 = vmatprep.subr.mxu0 0.0
    %154 = vmatpush1.msra.mxu0 0.0
    %155 = vmatprep.subr.mxu0 0.0
    %156 = vmatpush1.msra.mxu0 0.0
    %157 = vmatprep.subr.mxu0 0.0
    %158 = vmatpush1.msra.mxu0 0.0
    %159 = vmatprep.subr.mxu0 0.0
    %160 = vmatpush1.msra.mxu0 0.0
    %161 = vmatprep.subr.mxu0 0.0
    %162 = vmatpush1.msra.mxu0 0.0
    %163 = vmatprep.subr.mxu0 0.0
    %164 = vmatpush1.msra.mxu0 0.0
    %165 = vmatprep.subr.mxu0 0.0
    %166 = vmatpush1.msra.mxu0 0.0
    %167 = vmatprep.subr.mxu0 0.0
    %168 = vmatpush1.msra.mxu0 0.0
    %169 = vmatprep.subr.mxu0 0.0
    %170 = vmatpush1.msra.mxu0 0.0
    %171 = vmatprep.subr.mxu0 0.0
    %172 = vmatpush1.msra.mxu0 0.0
    %173 = vmatprep.subr.mxu0 0.0
    %174 = vmatpush1.msra.mxu0 0.0
    %175 = vmatprep.subr.mxu0 0.0
    %176 = vmatpush1.msra.mxu0 0.0
    %177 = vmatprep.subr.mxu0 0.0
    %178 = vmatpush1.msra.mxu0 0.0
    %179 = vmatprep.subr.mxu0 0.0
    %180 = vmatpush1.msra.mxu0 0.0
    %181 = vmatprep.mubr.f32.mxu0 0.0
    %182 = vmatmul.mubr.f32.gmra.mrb[0].mxu0 %v115
    %v183 = vpop.f32.mrb[0].mxu0
    %v184 = vadd.f32 0.0, %v183
    %v185 = vpop.f32.mrb[0].mxu0
    %186 = vdwg.mxu0
    %v187 = vadd.f32 %v69, %v184
    %v188 = vtanh.pop %v187
    %v190 = vsel %vm113, %v188, 0
    %192 = vmatprep.subr.mxu0 0.0
    %193 = vmatpush1.msra.mxu0 %v47
    %194 = vmatprep.subr.mxu0 0.0
    %195 = vmatpush1.msra.mxu0 %v48
    %196 = vmatprep.subr.mxu0 0.0
    %197 = vmatpush1.msra.mxu0 %v49
    %198 = vmatprep.subr.mxu0 0.0
    %199 = vmatpush1.msra.mxu0 %v50
    %200 = vmatprep.subr.mxu0 0.0
    %201 = vmatpush1.msra.mxu0 0.0
    %202 = vmatprep.subr.mxu0 0.0
    %203 = vmatpush1.msra.mxu0 0.0
    %204 = vmatprep.subr.mxu0 0.0
    %205 = vmatpush1.msra.mxu0 0.0
    %206 = vmatprep.subr.mxu0 0.0
    %207 = vmatpush1.msra.mxu0 0.0
    %208 = vmatprep.subr.mxu0 0.0
    %209 = vmatpush1.msra.mxu0 0.0
    %210 = vmatprep.subr.mxu0 0.0
    %211 = vmatpush1.msra.mxu0 0.0
    %212 = vmatprep.subr.mxu0 0.0
    %213 = vmatpush1.msra.mxu0 0.0
    %214 = vmatprep.subr.mxu0 0.0
    %215 = vmatpush1.msra.mxu0 0.0
    %216 = vmatprep.subr.mxu0 0.0
    %217 = vmatpush1.msra.mxu0 0.0
    %218 = vmatprep.subr.mxu0 0.0
    %219 = vmatpush1.msra.mxu0 0.0
    %220 = vmatprep.subr.mxu0 0.0
    %221 = vmatpush1.msra.mxu0 0.0
    %222 = vmatprep.subr.mxu0 0.0
    %223 = vmatpush1.msra.mxu0 0.0
    %224 = vmatprep.subr.mxu0 0.0
    %225 = vmatpush1.msra.mxu0 0.0
    %226 = vmatprep.subr.mxu0 0.0
    %227 = vmatpush1.msra.mxu0 0.0
    %228 = vmatprep.subr.mxu0 0.0
    %229 = vmatpush1.msra.mxu0 0.0
    %230 = vmatprep.subr.mxu0 0.0
    %231 = vmatpush1.msra.mxu0 0.0
    %232 = vmatprep.subr.mxu0 0.0
    %233 = vmatpush1.msra.mxu0 0.0
    %234 = vmatprep.subr.mxu0 0.0
    %235 = vmatpush1.msra.mxu0 0.0
    %236 = vmatprep.subr.mxu0 0.0
    %237 = vmatpush1.msra.mxu0 0.0
    %238 = vmatprep.subr.mxu0 0.0
    %239 = vmatpush1.msra.mxu0 0.0
    %240 = vmatprep.subr.mxu0 0.0
    %241 = vmatpush1.msra.mxu0 0.0
    %242 = vmatprep.subr.mxu0 0.0
    %243 = vmatpush1.msra.mxu0 0.0
    %244 = vmatprep.subr.mxu0 0.0
    %245 = vmatpush1.msra.mxu0 0.0
    %246 = vmatprep.subr.mxu0 0.0
    %247 = vmatpush1.msra.mxu0 0.0
    %248 = vmatprep.subr.mxu0 0.0
    %249 = vmatpush1.msra.mxu0 0.0
    %250 = vmatprep.subr.mxu0 0.0
    %251 = vmatpush1.msra.mxu0 0.0
    %252 = vmatprep.subr.mxu0 0.0
    %253 = vmatpush1.msra.mxu0 0.0
    %254 = vmatprep.subr.mxu0 0.0
    %255 = vmatpush1.msra.mxu0 0.0
    %256 = vmatprep.mubr.f32.mxu0 0.0
    %257 = vmatmul.mubr.f32.gmra.mrb[0].mxu0 %v190
    %v258 = vpop.f32.mrb[0].mxu0
    %v259 = vadd.f32 0.0, %v258
    %v260 = vpop.f32.mrb[0].mxu0
    %261 = vdwg.mxu0
    %v262 = vadd.f32 %v75, %v259
    %v263 = vtanh.pop %v262
    %v265 = vsel %vm113, %v263, 0
    %267 = vmatprep.subr.mxu0 0.0
    %268 = vmatpush1.msra.mxu0 %v47
    %269 = vmatprep.subr.mxu0 0.0
    %270 = vmatpush1.msra.mxu0 %v48
    %271 = vmatprep.subr.mxu0 0.0
    %272 = vmatpush1.msra.mxu0 %v49
    %273 = vmatprep.subr.mxu0 0.0
    %274 = vmatpush1.msra.mxu0 %v50
    %275 = vmatprep.subr.mxu0 0.0
    %276 = vmatpush1.msra.mxu0 0.0
    %277 = vmatprep.subr.mxu0 0.0
    %278 = vmatpush1.msra.mxu0 0.0
    %279 = vmatprep.subr.mxu0 0.0
    %280 = vmatpush1.msra.mxu0 0.0
    %281 = vmatprep.subr.mxu0 0.0
    %282 = vmatpush1.msra.mxu0 0.0
    %283 = vmatprep.subr.mxu0 0.0
    %284 = vmatpush1.msra.mxu0 0.0
    %285 = vmatprep.subr.mxu0 0.0
    %286 = vmatpush1.msra.mxu0 0.0
    %287 = vmatprep.subr.mxu0 0.0
    %288 = vmatpush1.msra.mxu0 0.0
    %289 = vmatprep.subr.mxu0 0.0
    %290 = vmatpush1.msra.mxu0 0.0
    %291 = vmatprep.subr.mxu0 0.0
    %292 = vmatpush1.msra.mxu0 0.0
    %293 = vmatprep.subr.mxu0 0.0
    %294 = vmatpush1.msra.mxu0 0.0
    %295 = vmatprep.subr.mxu0 0.0
    %296 = vmatpush1.msra.mxu0 0.0
    %297 = vmatprep.subr.mxu0 0.0
    %298 = vmatpush1.msra.mxu0 0.0
    %299 = vmatprep.subr.mxu0 0.0
    %300 = vmatpush1.msra.mxu0 0.0
    %301 = vmatprep.subr.mxu0 0.0
    %302 = vmatpush1.msra.mxu0 0.0
    %303 = vmatprep.subr.mxu0 0.0
    %304 = vmatpush1.msra.mxu0 0.0
    %305 = vmatprep.subr.mxu0 0.0
    %306 = vmatpush1.msra.mxu0 0.0
    %307 = vmatprep.subr.mxu0 0.0
    %308 = vmatpush1.msra.mxu0 0.0
    %309 = vmatprep.subr.mxu0 0.0
    %310 = vmatpush1.msra.mxu0 0.0
    %311 = vmatprep.subr.mxu0 0.0
    %312 = vmatpush1.msra.mxu0 0.0
    %313 = vmatprep.subr.mxu0 0.0
    %314 = vmatpush1.msra.mxu0 0.0
    %315 = vmatprep.subr.mxu0 0.0
    %316 = vmatpush1.msra.mxu0 0.0
    %317 = vmatprep.subr.mxu0 0.0
    %318 = vmatpush1.msra.mxu0 0.0
    %319 = vmatprep.subr.mxu0 0.0
    %320 = vmatpush1.msra.mxu0 0.0
    %321 = vmatprep.subr.mxu0 0.0
    %322 = vmatpush1.msra.mxu0 0.0
    %323 = vmatprep.subr.mxu0 0.0
    %324 = vmatpush1.msra.mxu0 0.0
    %325 = vmatprep.subr.mxu0 0.0
    %326 = vmatpush1.msra.mxu0 0.0
    %327 = vmatprep.subr.mxu0 0.0
    %328 = vmatpush1.msra.mxu0 0.0
    %329 = vmatprep.subr.mxu0 0.0
    %330 = vmatpush1.msra.mxu0 0.0
    %331 = vmatprep.mubr.f32.mxu0 0.0
    %332 = vmatmul.mubr.f32.gmra.mrb[0].mxu0 %v265
    %v333 = vpop.f32.mrb[0].mxu0
    %v334 = vadd.f32 0.0, %v333
    %v335 = vpop.f32.mrb[0].mxu0
    %336 = vdwg.mxu0
    %v337 = vadd.f32 %v81, %v334
    %v338 = vtanh.pop %v337
    %v340 = vsel %vm113, %v338, 0
    %342 = vmatprep.subr.mxu0 0.0
    %343 = vmatpush1.msra.mxu0 %v47
    %344 = vmatprep.subr.mxu0 0.0
    %345 = vmatpush1.msra.mxu0 %v48
    %346 = vmatprep.subr.mxu0 0.0
    %347 = vmatpush1.msra.mxu0 %v49
    %348 = vmatprep.subr.mxu0 0.0
    %349 = vmatpush1.msra.mxu0 %v50
    %350 = vmatprep.subr.mxu0 0.0
    %351 = vmatpush1.msra.mxu0 0.0
    %352 = vmatprep.subr.mxu0 0.0
    %353 = vmatpush1.msra.mxu0 0.0
    %354 = vmatprep.subr.mxu0 0.0
    %355 = vmatpush1.msra.mxu0 0.0
    %356 = vmatprep.subr.mxu0 0.0
    %357 = vmatpush1.msra.mxu0 0.0
    %358 = vmatprep.subr.mxu0 0.0
    %359 = vmatpush1.msra.mxu0 0.0
    %360 = vmatprep.subr.mxu0 0.0
    %361 = vmatpush1.msra.mxu0 0.0
    %362 = vmatprep.subr.mxu0 0.0
    %363 = vmatpush1.msra.mxu0 0.0
    %364 = vmatprep.subr.mxu0 0.0
    %365 = vmatpush1.msra.mxu0 0.0
    %366 = vmatprep.subr.mxu0 0.0
    %367 = vmatpush1.msra.mxu0 0.0
    %368 = vmatprep.subr.mxu0 0.0
    %369 = vmatpush1.msra.mxu0 0.0
    %370 = vmatprep.subr.mxu0 0.0
    %371 = vmatpush1.msra.mxu0 0.0
    %372 = vmatprep.subr.mxu0 0.0
    %373 = vmatpush1.msra.mxu0 0.0
    %374 = vmatprep.subr.mxu0 0.0
    %375 = vmatpush1.msra.mxu0 0.0
    %376 = vmatprep.subr.mxu0 0.0
    %377 = vmatpush1.msra.mxu0 0.0
    %378 = vmatprep.subr.mxu0 0.0
    %379 = vmatpush1.msra.mxu0 0.0
    %380 = vmatprep.subr.mxu0 0.0
    %381 = vmatpush1.msra.mxu0 0.0
    %382 = vmatprep.subr.mxu0 0.0
    %383 = vmatpush1.msra.mxu0 0.0
    %384 = vmatprep.subr.mxu0 0.0
    %385 = vmatpush1.msra.mxu0 0.0
    %386 = vmatprep.subr.mxu0 0.0
    %387 = vmatpush1.msra.mxu0 0.0
    %388 = vmatprep.subr.mxu0 0.0
    %389 = vmatpush1.msra.mxu0 0.0
    %390 = vmatprep.subr.mxu0 0.0
    %391 = vmatpush1.msra.mxu0 0.0
    %392 = vmatprep.subr.mxu0 0.0
    %393 = vmatpush1.msra.mxu0 0.0
    %394 = vmatprep.subr.mxu0 0.0
    %395 = vmatpush1.msra.mxu0 0.0
    %396 = vmatprep.subr.mxu0 0.0
    %397 = vmatpush1.msra.mxu0 0.0
    %398 = vmatprep.subr.mxu0 0.0
    %399 = vmatpush1.msra.mxu0 0.0
    %400 = vmatprep.subr.mxu0 0.0
    %401 = vmatpush1.msra.mxu0 0.0
    %402 = vmatprep.subr.mxu0 0.0
    %403 = vmatpush1.msra.mxu0 0.0
    %404 = vmatprep.subr.mxu0 0.0
    %405 = vmatpush1.msra.mxu0 0.0
    %406 = vmatprep.mubr.f32.mxu0 0.0
    %407 = vmatmul.mubr.f32.gmra.mrb[0].mxu0 %v340
    %v408 = vpop.f32.mrb[0].mxu0
    %v409 = vadd.f32 0.0, %v408
    %v410 = vpop.f32.mrb[0].mxu0
    %411 = vdwg.mxu0
    %v412 = vadd.f32 %v87, %v409
    %v413 = vtanh.pop %v412
    %v415 = vsel %vm113, %v413, 0
    %417 = vmatprep.subr.mxu0 0.0
    %418 = vmatpush1.msra.mxu0 %v47
    %419 = vmatprep.subr.mxu0 0.0
    %420 = vmatpush1.msra.mxu0 %v48
    %421 = vmatprep.subr.mxu0 0.0
    %422 = vmatpush1.msra.mxu0 %v49
    %423 = vmatprep.subr.mxu0 0.0
    %424 = vmatpush1.msra.mxu0 %v50
    %425 = vmatprep.subr.mxu0 0.0
    %426 = vmatpush1.msra.mxu0 0.0
    %427 = vmatprep.subr.mxu0 0.0
    %428 = vmatpush1.msra.mxu0 0.0
    %429 = vmatprep.subr.mxu0 0.0
    %430 = vmatpush1.msra.mxu0 0.0
    %431 = vmatprep.subr.mxu0 0.0
    %432 = vmatpush1.msra.mxu0 0.0
    %433 = vmatprep.subr.mxu0 0.0
    %434 = vmatpush1.msra.mxu0 0.0
    %435 = vmatprep.subr.mxu0 0.0
    %436 = vmatpush1.msra.mxu0 0.0
    %437 = vmatprep.subr.mxu0 0.0
    %438 = vmatpush1.msra.mxu0 0.0
    %439 = vmatprep.subr.mxu0 0.0
    %440 = vmatpush1.msra.mxu0 0.0
    %441 = vmatprep.subr.mxu0 0.0
    %442 = vmatpush1.msra.mxu0 0.0
    %443 = vmatprep.subr.mxu0 0.0
    %444 = vmatpush1.msra.mxu0 0.0
    %445 = vmatprep.subr.mxu0 0.0
    %446 = vmatpush1.msra.mxu0 0.0
    %447 = vmatprep.subr.mxu0 0.0
    %448 = vmatpush1.msra.mxu0 0.0
    %449 = vmatprep.subr.mxu0 0.0
    %450 = vmatpush1.msra.mxu0 0.0
    %451 = vmatprep.subr.mxu0 0.0
    %452 = vmatpush1.msra.mxu0 0.0
    %453 = vmatprep.subr.mxu0 0.0
    %454 = vmatpush1.msra.mxu0 0.0
    %455 = vmatprep.subr.mxu0 0.0
    %456 = vmatpush1.msra.mxu0 0.0
    %457 = vmatprep.subr.mxu0 0.0
    %458 = vmatpush1.msra.mxu0 0.0
    %459 = vmatprep.subr.mxu0 0.0
    %460 = vmatpush1.msra.mxu0 0.0
    %461 = vmatprep.subr.mxu0 0.0
    %462 = vmatpush1.msra.mxu0 0.0
    %463 = vmatprep.subr.mxu0 0.0
    %464 = vmatpush1.msra.mxu0 0.0
    %465 = vmatprep.subr.mxu0 0.0
    %466 = vmatpush1.msra.mxu0 0.0
    %467 = vmatprep.subr.mxu0 0.0
    %468 = vmatpush1.msra.mxu0 0.0
    %469 = vmatprep.subr.mxu0 0.0
    %470 = vmatpush1.msra.mxu0 0.0
    %471 = vmatprep.subr.mxu0 0.0
    %472 = vmatpush1.msra.mxu0 0.0
    %473 = vmatprep.subr.mxu0 0.0
    %474 = vmatpush1.msra.mxu0 0.0
    %475 = vmatprep.subr.mxu0 0.0
    %476 = vmatpush1.msra.mxu0 0.0
    %477 = vmatprep.subr.mxu0 0.0
    %478 = vmatpush1.msra.mxu0 0.0
    %479 = vmatprep.subr.mxu0 0.0
    %480 = vmatpush1.msra.mxu0 0.0
    %481 = vmatprep.mubr.f32.mxu0 0.0
    %482 = vmatmul.mubr.f32.gmra.mrb[0].mxu0 %v415
    %v483 = vpop.f32.mrb[0].mxu0
    %v484 = vadd.f32 0.0, %v483
    %v485 = vpop.f32.mrb[0].mxu0
    %486 = vdwg.mxu0
    %v487 = vadd.f32 %v93, %v484
    %v488 = vtanh.pop %v487
    %v490 = vsel %vm113, %v488, 0
    %492 = vmatprep.subr.mxu0 0.0
    %493 = vmatpush1.msra.mxu0 %v47
    %494 = vmatprep.subr.mxu0 0.0
    %495 = vmatpush1.msra.mxu0 %v48
    %496 = vmatprep.subr.mxu0 0.0
    %497 = vmatpush1.msra.mxu0 %v49
    %498 = vmatprep.subr.mxu0 0.0
    %499 = vmatpush1.msra.mxu0 %v50
    %500 = vmatprep.subr.mxu0 0.0
    %501 = vmatpush1.msra.mxu0 0.0
    %502 = vmatprep.subr.mxu0 0.0
    %503 = vmatpush1.msra.mxu0 0.0
    %504 = vmatprep.subr.mxu0 0.0
    %505 = vmatpush1.msra.mxu0 0.0
    %506 = vmatprep.subr.mxu0 0.0
    %507 = vmatpush1.msra.mxu0 0.0
    %508 = vmatprep.subr.mxu0 0.0
    %509 = vmatpush1.msra.mxu0 0.0
    %510 = vmatprep.subr.mxu0 0.0
    %511 = vmatpush1.msra.mxu0 0.0
    %512 = vmatprep.subr.mxu0 0.0
    %513 = vmatpush1.msra.mxu0 0.0
    %514 = vmatprep.subr.mxu0 0.0
    %515 = vmatpush1.msra.mxu0 0.0
    %516 = vmatprep.subr.mxu0 0.0
    %517 = vmatpush1.msra.mxu0 0.0
    %518 = vmatprep.subr.mxu0 0.0
    %519 = vmatpush1.msra.mxu0 0.0
    %520 = vmatprep.subr.mxu0 0.0
    %521 = vmatpush1.msra.mxu0 0.0
    %522 = vmatprep.subr.mxu0 0.0
    %523 = vmatpush1.msra.mxu0 0.0
    %524 = vmatprep.subr.mxu0 0.0
    %525 = vmatpush1.msra.mxu0 0.0
    %526 = vmatprep.subr.mxu0 0.0
    %527 = vmatpush1.msra.mxu0 0.0
    %528 = vmatprep.subr.mxu0 0.0
    %529 = vmatpush1.msra.mxu0 0.0
    %530 = vmatprep.subr.mxu0 0.0
    %531 = vmatpush1.msra.mxu0 0.0
    %532 = vmatprep.subr.mxu0 0.0
    %533 = vmatpush1.msra.mxu0 0.0
    %534 = vmatprep.subr.mxu0 0.0
    %535 = vmatpush1.msra.mxu0 0.0
    %536 = vmatprep.subr.mxu0 0.0
    %537 = vmatpush1.msra.mxu0 0.0
    %538 = vmatprep.subr.mxu0 0.0
    %539 = vmatpush1.msra.mxu0 0.0
    %540 = vmatprep.subr.mxu0 0.0
    %541 = vmatpush1.msra.mxu0 0.0
    %542 = vmatprep.subr.mxu0 0.0
    %543 = vmatpush1.msra.mxu0 0.0
    %544 = vmatprep.subr.mxu0 0.0
    %545 = vmatpush1.msra.mxu0 0.0
    %546 = vmatprep.subr.mxu0 0.0
    %547 = vmatpush1.msra.mxu0 0.0
    %548 = vmatprep.subr.mxu0 0.0
    %549 = vmatpush1.msra.mxu0 0.0
    %550 = vmatprep.subr.mxu0 0.0
    %551 = vmatpush1.msra.mxu0 0.0
    %552 = vmatprep.subr.mxu0 0.0
    %553 = vmatpush1.msra.mxu0 0.0
    %554 = vmatprep.subr.mxu0 0.0
    %555 = vmatpush1.msra.mxu0 0.0
    %556 = vmatprep.mubr.f32.mxu0 0.0
    %557 = vmatmul.mubr.f32.gmra.mrb[0].mxu0 %v490
    %v558 = vpop.f32.mrb[0].mxu0
    %v559 = vadd.f32 0.0, %v558
    %v560 = vpop.f32.mrb[0].mxu0
    %561 = vdwg.mxu0
    %v562 = vadd.f32 %v99, %v559
    %v563 = vtanh.pop %v562
    %v565 = vsel %vm113, %v563, 0
    %567 = vmatprep.subr.mxu0 0.0
    %568 = vmatpush1.msra.mxu0 %v47
    %569 = vmatprep.subr.mxu0 0.0
    %570 = vmatpush1.msra.mxu0 %v48
    %571 = vmatprep.subr.mxu0 0.0
    %572 = vmatpush1.msra.mxu0 %v49
    %573 = vmatprep.subr.mxu0 0.0
    %574 = vmatpush1.msra.mxu0 %v50
    %575 = vmatprep.subr.mxu0 0.0
    %576 = vmatpush1.msra.mxu0 0.0
    %577 = vmatprep.subr.mxu0 0.0
    %578 = vmatpush1.msra.mxu0 0.0
    %579 = vmatprep.subr.mxu0 0.0
    %580 = vmatpush1.msra.mxu0 0.0
    %581 = vmatprep.subr.mxu0 0.0
    %582 = vmatpush1.msra.mxu0 0.0
    %583 = vmatprep.subr.mxu0 0.0
    %584 = vmatpush1.msra.mxu0 0.0
    %585 = vmatprep.subr.mxu0 0.0
    %586 = vmatpush1.msra.mxu0 0.0
    %587 = vmatprep.subr.mxu0 0.0
    %588 = vmatpush1.msra.mxu0 0.0
    %589 = vmatprep.subr.mxu0 0.0
    %590 = vmatpush1.msra.mxu0 0.0
    %591 = vmatprep.subr.mxu0 0.0
    %592 = vmatpush1.msra.mxu0 0.0
    %593 = vmatprep.subr.mxu0 0.0
    %594 = vmatpush1.msra.mxu0 0.0
    %595 = vmatprep.subr.mxu0 0.0
    %596 = vmatpush1.msra.mxu0 0.0
    %597 = vmatprep.subr.mxu0 0.0
    %598 = vmatpush1.msra.mxu0 0.0
    %599 = vmatprep.subr.mxu0 0.0
    %600 = vmatpush1.msra.mxu0 0.0
    %601 = vmatprep.subr.mxu0 0.0
    %602 = vmatpush1.msra.mxu0 0.0
    %603 = vmatprep.subr.mxu0 0.0
    %604 = vmatpush1.msra.mxu0 0.0
    %605 = vmatprep.subr.mxu0 0.0
    %606 = vmatpush1.msra.mxu0 0.0
    %607 = vmatprep.subr.mxu0 0.0
    %608 = vmatpush1.msra.mxu0 0.0
    %609 = vmatprep.subr.mxu0 0.0
    %610 = vmatpush1.msra.mxu0 0.0
    %611 = vmatprep.subr.mxu0 0.0
    %612 = vmatpush1.msra.mxu0 0.0
    %613 = vmatprep.subr.mxu0 0.0
    %614 = vmatpush1.msra.mxu0 0.0
    %615 = vmatprep.subr.mxu0 0.0
    %616 = vmatpush1.msra.mxu0 0.0
    %617 = vmatprep.subr.mxu0 0.0
    %618 = vmatpush1.msra.mxu0 0.0
    %619 = vmatprep.subr.mxu0 0.0
    %620 = vmatpush1.msra.mxu0 0.0
    %621 = vmatprep.subr.mxu0 0.0
    %622 = vmatpush1.msra.mxu0 0.0
    %623 = vmatprep.subr.mxu0 0.0
    %624 = vmatpush1.msra.mxu0 0.0
    %625 = vmatprep.subr.mxu0 0.0
    %626 = vmatpush1.msra.mxu0 0.0
    %627 = vmatprep.subr.mxu0 0.0
    %628 = vmatpush1.msra.mxu0 0.0
    %629 = vmatprep.subr.mxu0 0.0
    %630 = vmatpush1.msra.mxu0 0.0
    %631 = vmatprep.mubr.f32.mxu0 0.0
    %632 = vmatmul.mubr.f32.gmra.mrb[0].mxu0 %v565
    %v633 = vpop.f32.mrb[0].mxu0
    %v634 = vadd.f32 0.0, %v633
    %v635 = vpop.f32.mrb[0].mxu0
    %636 = vdwg.mxu0
    %v637 = vadd.f32 %v105, %v634
    %v638 = vtanh.pop %v637
    %v640 = vsel %vm113, %v638, 0
    %642 = vmatprep.subr.mxu0 0.0
    %643 = vmatpush1.msra.mxu0 %v47
    %644 = vmatprep.subr.mxu0 0.0
    %645 = vmatpush1.msra.mxu0 %v48
    %646 = vmatprep.subr.mxu0 0.0
    %647 = vmatpush1.msra.mxu0 %v49
    %648 = vmatprep.subr.mxu0 0.0
    %649 = vmatpush1.msra.mxu0 %v50
    %650 = vmatprep.subr.mxu0 0.0
    %651 = vmatpush1.msra.mxu0 0.0
    %652 = vmatprep.subr.mxu0 0.0
    %653 = vmatpush1.msra.mxu0 0.0
    %654 = vmatprep.subr.mxu0 0.0
    %655 = vmatpush1.msra.mxu0 0.0
    %656 = vmatprep.subr.mxu0 0.0
    %657 = vmatpush1.msra.mxu0 0.0
    %658 = vmatprep.subr.mxu0 0.0
    %659 = vmatpush1.msra.mxu0 0.0
    %660 = vmatprep.subr.mxu0 0.0
    %661 = vmatpush1.msra.mxu0 0.0
    %662 = vmatprep.subr.mxu0 0.0
    %663 = vmatpush1.msra.mxu0 0.0
    %664 = vmatprep.subr.mxu0 0.0
    %665 = vmatpush1.msra.mxu0 0.0
    %666 = vmatprep.subr.mxu0 0.0
    %667 = vmatpush1.msra.mxu0 0.0
    %668 = vmatprep.subr.mxu0 0.0
    %669 = vmatpush1.msra.mxu0 0.0
    %670 = vmatprep.subr.mxu0 0.0
    %671 = vmatpush1.msra.mxu0 0.0
    %672 = vmatprep.subr.mxu0 0.0
    %673 = vmatpush1.msra.mxu0 0.0
    %674 = vmatprep.subr.mxu0 0.0
    %675 = vmatpush1.msra.mxu0 0.0
    %676 = vmatprep.subr.mxu0 0.0
    %677 = vmatpush1.msra.mxu0 0.0
    %678 = vmatprep.subr.mxu0 0.0
    %679 = vmatpush1.msra.mxu0 0.0
    %680 = vmatprep.subr.mxu0 0.0
    %681 = vmatpush1.msra.mxu0 0.0
    %682 = vmatprep.subr.mxu0 0.0
    %683 = vmatpush1.msra.mxu0 0.0
    %684 = vmatprep.subr.mxu0 0.0
    %685 = vmatpush1.msra.mxu0 0.0
    %686 = vmatprep.subr.mxu0 0.0
    %687 = vmatpush1.msra.mxu0 0.0
    %688 = vmatprep.subr.mxu0 0.0
    %689 = vmatpush1.msra.mxu0 0.0
    %690 = vmatprep.subr.mxu0 0.0
    %691 = vmatpush1.msra.mxu0 0.0
    %692 = vmatprep.subr.mxu0 0.0
    %693 = vmatpush1.msra.mxu0 0.0
    %694 = vmatprep.subr.mxu0 0.0
    %695 = vmatpush1.msra.mxu0 0.0
    %696 = vmatprep.subr.mxu0 0.0
    %697 = vmatpush1.msra.mxu0 0.0
    %698 = vmatprep.subr.mxu0 0.0
    %699 = vmatpush1.msra.mxu0 0.0
    %700 = vmatprep.subr.mxu0 0.0
    %701 = vmatpush1.msra.mxu0 0.0
    %702 = vmatprep.subr.mxu0 0.0
    %703 = vmatpush1.msra.mxu0 0.0
    %704 = vmatprep.subr.mxu0 0.0
    %705 = vmatpush1.msra.mxu0 0.0
    %706 = vmatprep.mubr.f32.mxu0 0.0
    %707 = vmatmul.mubr.f32.gmra.mrb[0].mxu0 %v640
    %v708 = vpop.f32.mrb[0].mxu0
    %v709 = vadd.f32 0.0, %v708
    %v710 = vpop.f32.mrb[0].mxu0
    %711 = vdwg.mxu0
    %v712 = vadd.f32 %v111, %v709
    %v713 = vtanh.pop %v712
    %vm714 = vcmask 254976
    %715 = vst.msk [vmem:[#allocation6] sm:$0x3] %vm714, %v713
    %v716 = vrot.slane %v188, 1
    %v718 = vrot.slane %v338, 7
    %v720 = vrot.slane %v413, 6
    %v722 = vrot.slane %v488, 5
    %v724 = vrot.slane %v563, 4
    %v726 = vrot.slane %v638, 3
    %v729 = vrot.slane %v713, 2
    %vm731 = vcmask 1040384
    %v732 = vsel %vm731, %v716, %v263
    %vm733 = vcmask 1041408
    %v734 = vsel %vm733, %v732, %v718
    %vm735 = vcmask 1042432
    %v736 = vsel %vm735, %v734, %v720
    %vm737 = vcmask 1043456
    %v738 = vsel %vm737, %v736, %v722
    %vm739 = vcmask 1044480
    %v740 = vsel %vm739, %v738, %v724
    %vm741 = vcmask 1045504
    %v742 = vsel %vm741, %v740, %v726
    %vm743 = vcmask 1046528
    %v744 = vsel %vm743, %v742, %v729
    %v745 = vld [vmem:[%s5] sm:$0x1]
    %v747 = vlaneseq
    %v748 = vshrl.u32 %v747, 7
    %v749 = vsub.s32 0, %v748
    %v750 = vrot.slane %v745, %v749
    %v752 = vmul.f32 %v744, %v750
    %v753 = vsel %vm113, %v752, 0.0
    %754 = vadd.xlane.f32.xlu0 %v753
    %v755 = vpop.xlane.xlu0 %754
    %s756 = sld [smem:[#allocation2]]
    %v757 = vstv %s756
    %v758 = vadd.f32 %v755, %v757
    %vm759 = vcmask 7168
    %760 = vst.msk [vmem:[%s7] sm:$0xff] %vm759, %v758
    // Predicated region
    $region34: #{tpu_custom_call.1} parent=1 // pred_check
      _
    $region35: #{tpu_custom_call.1} parent=1 // pred_check_branch
      %762 = sbr.rel (0) target = $region37
    $region36: #{tpu_custom_call.1} parent=1 // pred_region
      _
    $region37: #{tpu_custom_call.1} parent=1 // pred_fallthru
      _
    // Predicated region
    $region38: #{tpu_custom_call.1} parent=1 // pred_check
      _
    $region39: #{tpu_custom_call.1} parent=1 // pred_check_branch
      %764 = sbr.rel (0) target = $region41
    $region40: #{tpu_custom_call.1} parent=1 // pred_region
      %s766 = ssub.s32 32, 32
      %767 = vsyncadd [#allocation5], %s766
      %s769 = sshll.u32 [#allocation6], 4
      %s770 = int_to_ptr.vmem [resolvable:$true] %s769
      %772 = dma.vmem_to_hbm [thread:$0]  %s770, 32, %s8, [#allocation5]
    $region41: #{tpu_custom_call.1} parent=1 // pred_fallthru
      _
    // Predicated region
    $region42: #{tpu_custom_call.1} parent=1 // pred_check
      _
    $region43: #{tpu_custom_call.1} parent=1 // pred_check_branch
      %774 = sbr.rel (0) target = $region45
    $region44: #{tpu_custom_call.1} parent=1 // pred_region
      _
    $region45: #{tpu_custom_call.1} parent=1 // pred_fallthru
      _
    // Predicated region
    $region46: #{tpu_custom_call.1} parent=1 // pred_check
      _
    $region47: #{tpu_custom_call.1} parent=1 // pred_check_branch
      %776 = sbr.rel (0) target = $region49
    $region48: #{tpu_custom_call.1} parent=1 // pred_region
      %777 = dma.done [#allocation5], 32
    $region49: #{tpu_custom_call.1} parent=1 // pred_fallthru
      _
    %778 = vsyncpa [#allocation4], 1
    %779 = vsyncpa [#allocation5], 1

</llo_original>
